<compile_context>
chip_gen: v6e
topology: v6e:2x2x1
jax: 0.10.0
libtpu: 0.0.40
codegen_flags: <defaults>
</compile_context>

<pallas_src>
import functools

import jax
import jax.numpy as jnp
from jax.experimental import pallas as pl
from jax.experimental.pallas import tpu as pltpu


def _focal_nll_kernel(logits_ref, tgt_ref, out_ref, m_ref, s_ref, *,
                      n_total, c_total, tile_n, tile_c, mask_rows, mask_cols):
    i = pl.program_id(0)                       # batch tile ('parallel')
    j = pl.program_id(1)                       # class tile (reduction axis, last)
    last_j = pl.num_programs(1) - 1

    @pl.when(j == 0)
    def _init_row_state():
        m_ref[...] = jnp.full_like(m_ref, -jnp.inf)
        s_ref[...] = jnp.zeros_like(s_ref)

    x = logits_ref[...].astype(jnp.float32)    # bf16/f32 streamed, upcast in-register

    def _update(xv):
        # online (running-max) logsumexp across class tiles
        m_new = jnp.maximum(m_ref[...], jnp.max(xv, axis=-1, keepdims=True))
        s_ref[...] = (s_ref[...] * jnp.exp(m_ref[...] - m_new)
                      + jnp.sum(jnp.exp(xv - m_new), axis=-1, keepdims=True))
        m_ref[...] = m_new

    if mask_cols:                              # static: only when C % tile_c != 0
        @pl.when(j != last_j)
        def _full_tile():
            _update(x)

        @pl.when(j == last_j)
        def _ragged_tile():
            col = jax.lax.broadcasted_iota(jnp.int32, x.shape, 1) + j * tile_c
            # jnp.where select: NaN/Inf VMEM padding in unselected lanes never propagates
            _update(jnp.where(col < c_total, x, -jnp.inf))
    else:
        _update(x)

    @pl.when(j == last_j)
    def _row_finalize():
        lse = jnp.log(s_ref[...]) + m_ref[...]
        nll = lse - tgt_ref[...]               # per-sample -log p_i, shape (tile_n, 1)
        if mask_rows:                          # static: only when N % tile_n != 0
            row = jax.lax.broadcasted_iota(jnp.int32, nll.shape, 0) + i * tile_n
            nll = jnp.where(row < n_total, nll, 0.0)
        out_ref[...] = jnp.sum(nll, axis=0, keepdims=True).reshape(1, 1, 1)


def _vmem_capacity_bytes():
    # Generation-aware budget; conservative (v7x-sized) fallback if unavailable.
    try:
        return int(pltpu.get_tpu_info().vmem_capacity_bytes)
    except Exception:
        return 64 * 1024 * 1024


def focal_loss(logits, target, gamma=0.0, *, tile_n=None, tile_c=None):
    """logits: (N, C) float (f32 or bf16), target: (N,) int class ids. Returns scalar f32."""
    n, c = logits.shape
    itemsize = jnp.dtype(logits.dtype).itemsize

    # Target-class logit gathered once here (~N elements read), streamed into the
    # kernel as (N,1) f32, blocked by the batch tile only.
    # TODO(synk): for very large C, verify XLA lowers this to a true gather (not a
    # one-hot contraction); otherwise do it in a tiny precursor kernel.
    tgt_logits = jnp.take_along_axis(
        logits, target.astype(jnp.int32).reshape(n, 1), axis=-1).astype(jnp.float32)

    vmem_cap = _vmem_capacity_bytes()
    small_vmem = vmem_cap < (96 << 20)                 # v7x-class part (64 MiB / TC)
    budget = (4 << 20) if small_vmem else (6 << 20)    # bytes per logits block

    # --- class (lane) tile: full-C if it fits, else 128-aligned with a minimum so
    # each row's contiguous DMA segment stays >= ~1-2 KiB on every generation. ---
    min_tile_c = 512 if itemsize < 4 else 256
    if tile_c is None:
        tile_c = min(c, 2048)
    if tile_c >= c:
        tile_c = c
    else:
        tile_c = max(128, (tile_c // 128) * 128)
        if c >= min_tile_c:
            tile_c = max(tile_c, min_tile_c)

    # --- batch (sublane) tile: as large as the per-buffer budget allows. ---
    if tile_n is None:
        rows = max(8, budget // (tile_c * itemsize))
        rows = min(1024, (rows // 8) * 8)
        tile_n = n if n <= rows else rows
    if tile_n != n:
        tile_n = max(8, (tile_n // 8) * 8)

    grid_n = pl.cdiv(n, tile_n)
    grid_c = pl.cdiv(c, tile_c)

    # Explicit, generation-aware VMEM limit: 2x-buffered logits block + f32
    # upcast/exp temporaries + tiny scratch, with headroom; capped per part.
    est = (2 * tile_n * tile_c * itemsize       # double-buffered logits
           + 4 * tile_n * tile_c * 4            # f32 upcast + exp temporaries
           + 4 * tile_n * 4                     # tgt double-buffer + m/s scratch
           + (2 << 20))                         # headroom
    cap = (48 << 20) if small_vmem else (100 << 20)
    vmem_limit = int(min(cap, max(est, 16 << 20)))

    kernel = functools.partial(
        _focal_nll_kernel, n_total=n, c_total=c,
        tile_n=tile_n, tile_c=tile_c,
        mask_rows=(n % tile_n) != 0, mask_cols=(c % tile_c) != 0)

    partials = pl.pallas_call(
        kernel,
        # (grid_n, 1, 1): per-batch-tile partial NLL sums. Batch-tile axis is a
        # LEADING dim so the (8,128) block constraint is trivially satisfied and
        # 'parallel' semantics can shard it across v7x TensorCores.
        out_shape=jax.ShapeDtypeStruct((grid_n, 1, 1), jnp.float32),
        grid_spec=pltpu.PrefetchScalarGridSpec(
            num_scalar_prefetch=0,
            grid=(grid_n, grid_c),
            in_specs=[
                pl.BlockSpec((tile_n, tile_c), lambda i, j: (i, j)),
                # target-logit block ignores the class axis -> fetched once per row tile
                pl.BlockSpec((tile_n, 1), lambda i, j: (i, 0)),
            ],
            out_specs=pl.BlockSpec((1, 1, 1), lambda i, j: (i, 0, 0)),
            scratch_shapes=[
                pltpu.VMEM((tile_n, 1), jnp.float32),   # running max
                pltpu.VMEM((tile_n, 1), jnp.float32),   # running rescaled exp-sum
            ]),
        compiler_params=pltpu.CompilerParams(
            dimension_semantics=("parallel", "arbitrary"),
            vmem_limit_bytes=vmem_limit),
        cost_estimate=pl.CostEstimate(
            flops=4 * n * c,
            transcendentals=n * c,
            bytes_accessed=n * c * itemsize + n * 4 + grid_n * 4),
    )(logits, tgt_logits)

    # Tiny epilogue on the (grid_n,) partials (scalar work, stays in the wrapper).
    logp = jnp.sum(partials) / n                # CrossEntropyLoss(reduction='mean')
    p = jnp.exp(-logp)
    base = jnp.maximum(1.0 - p, 0.0)            # clamp: rounding can make p marginally > 1
    return base ** float(gamma) * logp          # focal reweighting, applied once to the mean


def _focal_loss_ref(logits, target, gamma=0.0):
    # pure-JAX reference mirroring torch semantics
    x = logits.astype(jnp.float32)
    lse = jax.nn.logsumexp(x, axis=-1)
    tgt = jnp.take_along_axis(x, target[:, None].astype(jnp.int32), axis=-1)[:, 0]
    logp = jnp.mean(lse - tgt)
    p = jnp.exp(-logp)
    return (1.0 - p) ** gamma * logp


if __name__ == "__main__":
    key = jax.random.PRNGKey(0)
    k1, k2, k3, k4 = jax.random.split(key, 4)
    gamma = 2.0                                 # exercise the focal term (module default is 0)

    # Case 1: small shapes consistent with the module usage (f32, single tile).
    N, C = 8, 32
    logits = jax.random.normal(k1, (N, C), dtype=jnp.float32)
    target = jax.random.randint(k2, (N,), 0, C, dtype=jnp.int32)
    loss = focal_loss(logits, target, gamma=gamma)
    jax.block_until_ready(loss)
    ref = _focal_loss_ref(logits, target, gamma=gamma)
    assert jnp.allclose(loss, ref, rtol=1e-5, atol=1e-6), (loss, ref)

    # gamma = 0 (module default) degenerates to plain mean cross-entropy.
    loss0 = focal_loss(logits, target, gamma=0.0)
    jax.block_until_ready(loss0)
    ref0 = _focal_loss_ref(logits, target, gamma=0.0)
    assert jnp.allclose(loss0, ref0, rtol=1e-5, atol=1e-6), (loss0, ref0)

    # Case 2: bf16 streaming + forced small tiles to exercise the tiled
    # online-logsumexp path with ragged (masked) batch/class edges.
    N2, C2 = 20, 160
    logits2 = jax.random.normal(k3, (N2, C2), dtype=jnp.float32).astype(jnp.bfloat16)
    target2 = jax.random.randint(k4, (N2,), 0, C2, dtype=jnp.int32)
    loss2 = focal_loss(logits2, target2, gamma=gamma, tile_n=8, tile_c=128)
    jax.block_until_ready(loss2)
    ref2 = _focal_loss_ref(logits2, target2, gamma=gamma)
    assert jnp.allclose(loss2, ref2, rtol=1e-4, atol=1e-5), (loss2, ref2)

    print("KERNEL_OK")
</pallas_src>

<mosaic_0001>
module attributes {stable_mosaic.version = 11 : i64} {
  func.func @_focal_nll_kernel(%arg0: i32, %arg1: i32, %arg2: memref<8x32xf32, #tpu.memory_space<vmem>>, %arg3: memref<8x1xf32, #tpu.memory_space<vmem>>, %arg4: memref<1x1x1xf32, #tpu.memory_space<vmem>>, %arg5: memref<8x1xf32, #tpu.memory_space<vmem>>, %arg6: memref<8x1xf32, #tpu.memory_space<vmem>>) attributes {dimension_semantics = [#tpu.dimension_semantics<parallel>, #tpu.dimension_semantics<arbitrary>], iteration_bounds = array<i64: 1, 1>, scalar_prefetch = 0 : i64, scratch_operands = 2 : i64, tpu.core_type = #tpu.core_type<tc>, window_params = [{transform_indices = @transform_0, window_bounds = array<i64: 8, 32>}, {transform_indices = @transform_1, window_bounds = array<i64: 8, 1>}, {transform_indices = @transform_2, window_bounds = array<i64: 1, 1, 1>}]} {
    %c0_i32 = arith.constant 0 : i32
    %0 = arith.cmpi eq, %arg1, %c0_i32 : i32
    %1 = arith.extui %0 : i1 to i32
    %c0_i32_0 = arith.constant 0 : i32
    %2 = arith.cmpi ne, %1, %c0_i32_0 : i32
    scf.if %2 {
      %cst_15 = arith.constant 0xFF800000 : f32
      %24 = vector.broadcast %cst_15 : f32 to vector<8x1xf32>
      %c0_16 = arith.constant 0 : index
      %c0_17 = arith.constant 0 : index
      %25 = vector.load %arg5[%c0_16, %c0_17] : memref<8x1xf32, #tpu.memory_space<vmem>>, vector<8x1xf32>
      tpu.vector_store %arg5[%c0_16, %c0_17], %24 {strides = array<i32>} : memref<8x1xf32, #tpu.memory_space<vmem>>, vector<8x1xf32>,
      %cst_18 = arith.constant 0.000000e+00 : f32
      %26 = vector.broadcast %cst_18 : f32 to vector<8x1xf32>
      %c0_19 = arith.constant 0 : index
      %c0_20 = arith.constant 0 : index
      %27 = vector.load %arg6[%c0_19, %c0_20] : memref<8x1xf32, #tpu.memory_space<vmem>>, vector<8x1xf32>
      tpu.vector_store %arg6[%c0_19, %c0_20], %26 {strides = array<i32>} : memref<8x1xf32, #tpu.memory_space<vmem>>, vector<8x1xf32>,
    } else {
    }
    %c0 = arith.constant 0 : index
    %c0_1 = arith.constant 0 : index
    %3 = vector.load %arg2[%c0, %c0_1] : memref<8x32xf32, #tpu.memory_space<vmem>>, vector<8x32xf32>
    %c0_2 = arith.constant 0 : index
    %c0_3 = arith.constant 0 : index
    %4 = vector.load %arg5[%c0_2, %c0_3] : memref<8x1xf32, #tpu.memory_space<vmem>>, vector<8x1xf32>
    %cst = arith.constant dense<0xFF800000> : vector<8xf32>
    %5 = vector.multi_reduction <maximumf>, %3, %cst [1] : vector<8x32xf32> to vector<8xf32>
    %6 = vector.shape_cast %5 : vector<8xf32> to vector<8x1xf32>
    %7 = arith.maximumf %4, %6 : vector<8x1xf32>
    %c0_4 = arith.constant 0 : index
    %c0_5 = arith.constant 0 : index
    %8 = vector.load %arg6[%c0_4, %c0_5] : memref<8x1xf32, #tpu.memory_space<vmem>>, vector<8x1xf32>
    %c0_6 = arith.constant 0 : index
    %c0_7 = arith.constant 0 : index
    %9 = vector.load %arg5[%c0_6, %c0_7] : memref<8x1xf32, #tpu.memory_space<vmem>>, vector<8x1xf32>
    %10 = arith.subf %9, %7 : vector<8x1xf32>
    %11 = math.exp %10 : vector<8x1xf32>
    %12 = arith.mulf %8, %11 : vector<8x1xf32>
    %13 = vector.broadcast %7 : vector<8x1xf32> to vector<8x32xf32>
    %14 = arith.subf %3, %13 : vector<8x32xf32>
    %15 = math.exp %14 : vector<8x32xf32>
    %cst_8 = arith.constant dense<0.000000e+00> : vector<8xf32>
    %16 = vector.multi_reduction <add>, %15, %cst_8 [1] : vector<8x32xf32> to vector<8xf32>
    %17 = vector.shape_cast %16 : vector<8xf32> to vector<8x1xf32>
    %18 = arith.addf %12, %17 : vector<8x1xf32>
    %c0_9 = arith.constant 0 : index
    %c0_10 = arith.constant 0 : index
    %19 = vector.load %arg6[%c0_9, %c0_10] : memref<8x1xf32, #tpu.memory_space<vmem>>, vector<8x1xf32>
    tpu.vector_store %arg6[%c0_9, %c0_10], %18 {strides = array<i32>} : memref<8x1xf32, #tpu.memory_space<vmem>>, vector<8x1xf32>,
    %c0_11 = arith.constant 0 : index
    %c0_12 = arith.constant 0 : index
    %20 = vector.load %arg5[%c0_11, %c0_12] : memref<8x1xf32, #tpu.memory_space<vmem>>, vector<8x1xf32>
    tpu.vector_store %arg5[%c0_11, %c0_12], %7 {strides = array<i32>} : memref<8x1xf32, #tpu.memory_space<vmem>>, vector<8x1xf32>,
    %c0_i32_13 = arith.constant 0 : i32
    %21 = arith.cmpi eq, %arg1, %c0_i32_13 : i32
    %22 = arith.extui %21 : i1 to i32
    %c0_i32_14 = arith.constant 0 : i32
    %23 = arith.cmpi ne, %22, %c0_i32_14 : i32
    scf.if %23 {
      %c0_15 = arith.constant 0 : index
      %c0_16 = arith.constant 0 : index
      %24 = vector.load %arg6[%c0_15, %c0_16] : memref<8x1xf32, #tpu.memory_space<vmem>>, vector<8x1xf32>
      %25 = math.log %24 : vector<8x1xf32>
      %c0_17 = arith.constant 0 : index
      %c0_18 = arith.constant 0 : index
      %26 = vector.load %arg5[%c0_17, %c0_18] : memref<8x1xf32, #tpu.memory_space<vmem>>, vector<8x1xf32>
      %27 = arith.addf %25, %26 : vector<8x1xf32>
      %c0_19 = arith.constant 0 : index
      %c0_20 = arith.constant 0 : index
      %28 = vector.load %arg3[%c0_19, %c0_20] : memref<8x1xf32, #tpu.memory_space<vmem>>, vector<8x1xf32>
      %29 = arith.subf %27, %28 : vector<8x1xf32>
      %cst_21 = arith.constant dense<0.000000e+00> : vector<1xf32>
      %30 = vector.multi_reduction <add>, %29, %cst_21 [0] : vector<8x1xf32> to vector<1xf32>
      %31 = vector.shape_cast %30 : vector<1xf32> to vector<1x1xf32>
      %32 = vector.shape_cast %31 : vector<1x1xf32> to vector<1x1x1xf32>
      %c0_22 = arith.constant 0 : index
      %c0_23 = arith.constant 0 : index
      %c0_24 = arith.constant 0 : index
      %33 = vector.load %arg4[%c0_22, %c0_23, %c0_24] : memref<1x1x1xf32, #tpu.memory_space<vmem>>, vector<1x1x1xf32>
      tpu.vector_store %arg4[%c0_22, %c0_23, %c0_24], %32 {strides = array<i32>} : memref<1x1x1xf32, #tpu.memory_space<vmem>>, vector<1x1x1xf32>,
    } else {
    }
    return
  }
  func.func @transform_0(%arg0: i32, %arg1: i32) -> (i32, i32) {
    %c0_i32 = arith.constant 0 : i32
    return %arg0, %arg1 : i32, i32
  }
  func.func @transform_1(%arg0: i32, %arg1: i32) -> (i32, i32) {
    %c0_i32 = arith.constant 0 : i32
    %c0_i32_0 = arith.constant 0 : i32
    return %arg0, %c0_i32 : i32, i32
  }
  func.func @transform_2(%arg0: i32, %arg1: i32) -> (i32, i32, i32) {
    %c0_i32 = arith.constant 0 : i32
    %c0_i32_0 = arith.constant 0 : i32
    %c0_i32_1 = arith.constant 0 : i32
    return %arg0, %c0_i32, %c0_i32_0 : i32, i32, i32
  }
}

</mosaic_0001>

<llo_original>
// kernel: tpu_custom_call.1
$region0: #{tpu_custom_call.1}
  #allocation0 [shape = 'u32[]', space=smem, size = 0x4, offset = 0x4, fixed_abs, tag = 'smem constant byte address 0x4 - core index']
  #allocation1 [shape = 'u32[144,128]{1,0:T(1,128)}', space=vmem, size = 0x12000, scoped, tag = 'internal scratch']
  #allocation2 [shape = 'f32[8,1]{1,0:T(8,128)}', space=vmem, size = 0x1000, scoped, tag = 'scratch operand']
  #allocation3 [shape = 'f32[8,1]{1,0:T(8,128)}', space=vmem, size = 0x1000, scoped, tag = 'scratch operand']
  %s0 = inlined_call_operand.vmem [shape: f32[8,32], index: 0, kind: input, shape index: {}]
  %s1 = inlined_call_operand.vmem [shape: f32[8,1], index: 1, kind: input, shape index: {}]
  %s2 = inlined_call_operand.hbm [shape: f32[1,1,1], index: 2, kind: output, shape index: {}]
  %s3 = sld [smem:[#allocation0]]
  $region26: #{tpu_custom_call.1} parent=0
    _
  %s5 = ssub.s32 1, %s3
  %s6 = scalar_select 0, %s5, %s3
  $region1: #{tpu_custom_call.1} parent=0
    #allocation4 [shape = 'u8[512]{0}', space=vmem, size = 0x400, scoped, tag = 'output window, operand 0, single buffered']
    #allocation5 [shape = 's32[1]{0}', space=sflag, size = 0x4, scoped, tag = 'scoped memory for tpu_custom_call.1']
    %7 = vsyncpa [#allocation5], 0
    // Predicated region
    $region2: #{tpu_custom_call.1} parent=1 // pred_check
      _
    $region3: #{tpu_custom_call.1} parent=1 // pred_check_branch
      %9 = sbr.rel (0) target = $region5
    $region4: #{tpu_custom_call.1} parent=1 // pred_region
      _
    $region5: #{tpu_custom_call.1} parent=1 // pred_fallthru
      _
    // Predicated region
    $region6: #{tpu_custom_call.1} parent=1 // pred_check
      _
    $region7: #{tpu_custom_call.1} parent=1 // pred_check_branch
      %11 = sbr.rel (0) target = $region9
    $region8: #{tpu_custom_call.1} parent=1 // pred_region
      _
    $region9: #{tpu_custom_call.1} parent=1 // pred_fallthru
      _
    %p12 = scmp.eq.s32.totalorder 0, 0
    // Predicated region
    $region10: #{tpu_custom_call.1} parent=1 // pred_check
      %p13 = pneg %p12
    $region11: #{tpu_custom_call.1} parent=1 // pred_check_branch
      %15 = sbr.rel (%p13) target = $region13
    $region12: #{tpu_custom_call.1} parent=1 // pred_region
      %vm16 = vcmask 7168
      %17 = vst.msk [vmem:[#allocation2] sm:$0xff] %vm16, -inf
      %18 = vst.msk [vmem:[#allocation3] sm:$0xff] %vm16, 0.0
    $region13: #{tpu_custom_call.1} parent=1 // pred_fallthru
      _
    %v19 = vld [vmem:[%s0] sm:$0xff]
    %v20 = vld [vmem:[#allocation2] sm:$0xff]
    %vm21 = vcmask 261120
    %v22 = vsel %vm21, %v19, -inf
    %23 = vmax.xlane.f32.xlu0 %v22
    %v24 = vpop.xlane.xlu0 %23
    %v25 = vmax.f32 %v20, %v24
    %v26 = vld [vmem:[#allocation3] sm:$0xff]
    %v27 = vsub.f32 %v20, %v25
    %v28 = vmul.f32 %v27, 1.442695
    %v29 = vpow.pop %v28
    %v30 = vmul.f32 %v26, %v29
    %32 = vset.pattern.permute.xlu0 0
    %33 = vperm.xlu0 %32, %v25
    %v34 = vpop.permute.xlu0 %33
    %v36 = vsub.f32 %v19, %v34
    %v37 = vmul.f32 %v36, 1.442695
    %v38 = vpow.pop %v37
    %v39 = vsel %vm21, %v38, 0.0
    %40 = vadd.xlane.f32.xlu0 %v39
    %v41 = vpop.xlane.xlu0 %40
    %v42 = vadd.f32 %v30, %v41
    %vm43 = vcmask 7168
    %44 = vst.msk [vmem:[#allocation3] sm:$0xff] %vm43, %v42
    %45 = vst.msk [vmem:[#allocation2] sm:$0xff] %vm43, %v25
    // Predicated region
    $region14: #{tpu_custom_call.1} parent=1 // pred_check
      %p46 = pneg %p12
    $region15: #{tpu_custom_call.1} parent=1 // pred_check_branch
      %48 = sbr.rel (%p46) target = $region17
    $region16: #{tpu_custom_call.1} parent=1 // pred_region
      %v49 = vld [vmem:[#allocation3] sm:$0xff]
      %v50 = vlog2.pop %v49
      %v51 = vmul.f32 %v50, 0.6931472
      %v52 = vld [vmem:[#allocation2] sm:$0xff]
      %v53 = vadd.f32 %v51, %v52
      %v54 = vld [vmem:[%s1] sm:$0xff]
      %v55 = vsub.f32 %v53, %v54
      %v56 = vsel %vm43, %v55, 0.0
      %v57 = vrot.slane %v56, 4
      %v58 = vadd.f32 %v56, %v57
      %v59 = vrot.slane %v58, 2
      %v60 = vadd.f32 %v58, %v59
      %v61 = vrot.slane %v60, 1
      %v62 = vadd.f32 %v60, %v61
      %vm63 = vcmask 0
      %64 = vst.msk [vmem:[#allocation4] sm:$0x1] %vm63, %v62
    $region17: #{tpu_custom_call.1} parent=1 // pred_fallthru
      _
    // Predicated region
    $region18: #{tpu_custom_call.1} parent=1 // pred_check
      _
    $region19: #{tpu_custom_call.1} parent=1 // pred_check_branch
      %66 = sbr.rel (0) target = $region21
    $region20: #{tpu_custom_call.1} parent=1 // pred_region
      %s68 = ssub.s32 16, 16
      %69 = vsyncadd [#allocation5], %s68
      %s71 = sshll.u32 [#allocation4], 4
      %s72 = int_to_ptr.vmem [resolvable:$true] %s71
      %74 = dma.vmem_to_hbm [thread:$0]  %s72, 16, %s2, [#allocation5]
    $region21: #{tpu_custom_call.1} parent=1 // pred_fallthru
      _
    // Predicated region
    $region22: #{tpu_custom_call.1} parent=1 // pred_check
      _
    $region23: #{tpu_custom_call.1} parent=1 // pred_check_branch
      %76 = sbr.rel (0) target = $region25
    $region24: #{tpu_custom_call.1} parent=1 // pred_region
      %77 = dma.done [#allocation5], 16
    $region25: #{tpu_custom_call.1} parent=1 // pred_fallthru
      _
    %78 = vsyncpa [#allocation5], 1

</llo_original>
